<compile_context>
chip_gen: v5e
topology: v5e:2x2
jax: 0.10.0
libtpu: 0.0.40
codegen_flags: <defaults>
</compile_context>

<pallas_src>
import numpy as np
import jax
import jax.numpy as jnp
from jax.experimental import pallas as pl
from jax.experimental.pallas import tpu as pltpu


_VMEM_LIMIT = 64 * 1024 * 1024      # explicit scoped-VMEM cap (fits all gens)
_INV_SQRT2 = 0.7071067811865476


# ----------------------------------------------------------------------------
# Small in-kernel helpers
# ----------------------------------------------------------------------------
def _layer_norm(x, w, b, eps=1e-5):
    """LayerNorm in f32 (matches whisper LayerNorm.forward)."""
    mean = jnp.mean(x, axis=-1, keepdims=True)
    var = jnp.mean(jnp.square(x - mean), axis=-1, keepdims=True)
    return (x - mean) * jax.lax.rsqrt(var + eps) * w + b


def _erf(x):
    """Abramowitz & Stegun 7.1.26 rational erf approximation (|err| <= 1.5e-7).
    Built from exp only (EUP slot), avoids relying on a native erf lowering."""
    a1, a2, a3, a4, a5 = (0.254829592, -0.284496736, 1.421413741,
                          -1.453152027, 1.061405429)
    p = 0.3275911
    z = jnp.abs(x)
    t = 1.0 / (1.0 + p * z)
    poly = ((((a5 * t + a4) * t + a3) * t + a2) * t + a1) * t
    y = 1.0 - poly * jnp.exp(-z * z)
    return jnp.where(x < 0.0, -y, y)


def _gelu_exact(x):
    """Exact (erf) GELU, matching torch.nn.GELU() default."""
    return 0.5 * x * (1.0 + _erf(x * _INV_SQRT2))


def _pick_tile(total, preferred, align):
    """Largest tile <= preferred that divides `total` and is a multiple of
    `align`; falls back to the full extent (always a legal single block)."""
    if total <= preferred:
        return total
    t = (preferred // align) * align
    while t >= align:
        if total % t == 0:
            return t
        t -= align
    return total


# ----------------------------------------------------------------------------
# Kernel 1: attn_ln + Q/K/V projections, written head-split (B, H, T, hd)
# ----------------------------------------------------------------------------
def _ln_qkv_kernel(x_ref, lnw_ref, lnb_ref,
                   wq_ref, bq_ref, wk_ref, wv_ref, bv_ref,
                   q_ref, k_ref, v_ref):
    n_head = q_ref.shape[1]
    hd = q_ref.shape[3]
    scale = hd ** (-0.25)

    x = x_ref[0].astype(jnp.float32)                      # (TT, D)
    xn = _layer_norm(x, lnw_ref[...], lnb_ref[...]).astype(jnp.bfloat16)

    # bf16 operands, f32 accumulation on the MXU.
    q = jnp.dot(xn, wq_ref[...], preferred_element_type=jnp.float32) + bq_ref[...]
    k = jnp.dot(xn, wk_ref[...], preferred_element_type=jnp.float32)   # no bias
    v = jnp.dot(xn, wv_ref[...], preferred_element_type=jnp.float32) + bv_ref[...]

    q = (q * scale).astype(jnp.bfloat16)
    k = (k * scale).astype(jnp.bfloat16)
    v = v.astype(jnp.bfloat16)

    # Head-split via static lane slices (no in-kernel reshape/transpose).
    for h in range(n_head):
        sl = slice(h * hd, (h + 1) * hd)
        q_ref[0, h] = q[:, sl]
        k_ref[0, h] = k[:, sl]
        v_ref[0, h] = v[:, sl]


# ----------------------------------------------------------------------------
# Kernel 2: flash-style attention (online softmax) + out-proj + residual
# ----------------------------------------------------------------------------
def _flash_attn_kernel(q_ref, k_ref, v_ref, x_ref, wo_ref, bo_ref,
                       o_ref, m_scr, l_scr, acc_scr):
    ki = pl.program_id(2)
    n_head = q_ref.shape[1]
    hd = q_ref.shape[3]

    @pl.when(ki == 0)
    def _init():
        m_scr[...] = jnp.full(m_scr.shape, -jnp.inf, dtype=m_scr.dtype)
        l_scr[...] = jnp.zeros(l_scr.shape, dtype=l_scr.dtype)
        acc_scr[...] = jnp.zeros(acc_scr.shape, dtype=acc_scr.dtype)

    q = q_ref[0]                                          # (H, TQ, hd) bf16
    k = k_ref[0]                                          # (H, TKV, hd) bf16
    v = v_ref[0]                                          # (H, TKV, hd) bf16

    # Batched-over-heads scores: (H, TQ, TKV), f32 accumulation.
    s = jnp.einsum('hqd,hkd->hqk', q, k, preferred_element_type=jnp.float32)

    m_prev = m_scr[...]                                   # (H, TQ, 1)
    m_new = jnp.maximum(m_prev, jnp.max(s, axis=-1, keepdims=True))
    alpha = jnp.exp(m_prev - m_new)                       # (H, TQ, 1)
    p = jnp.exp(s - m_new)                                # (H, TQ, TKV) f32
    l_scr[...] = alpha * l_scr[...] + jnp.sum(p, axis=-1, keepdims=True)
    acc_scr[...] = alpha * acc_scr[...] + jnp.einsum(
        'hqk,hkd->hqd', p.astype(jnp.bfloat16), v,
        preferred_element_type=jnp.float32)
    m_scr[...] = m_new

    @pl.when(ki == pl.num_programs(2) - 1)
    def _finalize():
        inv_l = pl.reciprocal(l_scr[...], approx=True)    # (H, TQ, 1)
        ctx = acc_scr[...] * inv_l                        # (H, TQ, hd) f32
        # residual + bias + per-head output projection (accumulated in f32).
        out = x_ref[0].astype(jnp.float32) + bo_ref[...]  # (TQ, D)
        for h in range(n_head):
            out += jnp.dot(ctx[h].astype(jnp.bfloat16),
                           wo_ref[h * hd:(h + 1) * hd, :],
                           preferred_element_type=jnp.float32)
        o_ref[0] = out.astype(o_ref.dtype)


# ----------------------------------------------------------------------------
# Kernel 3: mlp_ln -> Linear -> GELU -> Linear (+ residual), Dm-tiled
# ----------------------------------------------------------------------------
def _mlp_kernel(x_ref, lnw_ref, lnb_ref, w1_ref, b1_ref, w2_ref, b2_ref,
                o_ref, xn_scr, acc_scr):
    mi = pl.program_id(2)

    @pl.when(mi == 0)
    def _init():
        x = x_ref[0].astype(jnp.float32)
        xn = _layer_norm(x, lnw_ref[...], lnb_ref[...])
        xn_scr[...] = xn.astype(jnp.bfloat16)
        acc_scr[...] = jnp.zeros(acc_scr.shape, dtype=acc_scr.dtype)

    h = jnp.dot(xn_scr[...], w1_ref[...],
                preferred_element_type=jnp.float32) + b1_ref[...]
    h = _gelu_exact(h)
    acc_scr[...] += jnp.dot(h.astype(jnp.bfloat16), w2_ref[...],
                            preferred_element_type=jnp.float32)

    @pl.when(mi == pl.num_programs(2) - 1)
    def _finalize():
        x = x_ref[0].astype(jnp.float32)
        o_ref[0] = (x + acc_scr[...] + b2_ref[...]).astype(o_ref.dtype)


# ----------------------------------------------------------------------------
# Wrappers (BlockSpecs / grids)
# ----------------------------------------------------------------------------
def prepare_params(p, compute_dtype=jnp.bfloat16):
    """One-time weight prep: transpose to (in, out) layout + cast to bf16.
    Biases / LayerNorm params stay f32 (elementwise f32 path)."""
    f32 = jnp.float32
    return dict(
        attn_ln_w=p["attn_ln_w"].astype(f32)[None, :],
        attn_ln_b=p["attn_ln_b"].astype(f32)[None, :],
        wq_t=p["wq"].T.astype(compute_dtype), bq=p["bq"].astype(f32)[None, :],
        wk_t=p["wk"].T.astype(compute_dtype),
        wv_t=p["wv"].T.astype(compute_dtype), bv=p["bv"].astype(f32)[None, :],
        wo_t=p["wo"].T.astype(compute_dtype), bo=p["bo"].astype(f32)[None, :],
        mlp_ln_w=p["mlp_ln_w"].astype(f32)[None, :],
        mlp_ln_b=p["mlp_ln_b"].astype(f32)[None, :],
        w1_t=p["w1"].T.astype(compute_dtype), b1=p["b1"].astype(f32)[None, :],
        w2_t=p["w2"].T.astype(compute_dtype), b2=p["b2"].astype(f32)[None, :],
    )


def _qkv_pass(x, p, n_head, *, seq_tile):
    B, T, D = x.shape
    H = n_head
    hd = D // H
    TT = _pick_tile(T, seq_tile, 8)
    qkv_shape = jax.ShapeDtypeStruct((B, H, T, hd), jnp.bfloat16)

    def const2(shape):
        return pl.BlockSpec(shape, lambda b, t: (0,) * len(shape))

    return pl.pallas_call(
        _ln_qkv_kernel,
        out_shape=(qkv_shape, qkv_shape, qkv_shape),
        grid=(B, T // TT),
        in_specs=[
            pl.BlockSpec((1, TT, D), lambda b, t: (b, t, 0)),
            const2((1, D)), const2((1, D)),                  # attn_ln w, b
            const2((D, D)), const2((1, D)),                  # Wq^T, bq
            const2((D, D)),                                  # Wk^T (no bias)
            const2((D, D)), const2((1, D)),                  # Wv^T, bv
        ],
        out_specs=(
            pl.BlockSpec((1, H, TT, hd), lambda b, t: (b, 0, t, 0)),
            pl.BlockSpec((1, H, TT, hd), lambda b, t: (b, 0, t, 0)),
            pl.BlockSpec((1, H, TT, hd), lambda b, t: (b, 0, t, 0)),
        ),
        compiler_params=pltpu.CompilerParams(
            dimension_semantics=("parallel", "parallel"),
            vmem_limit_bytes=_VMEM_LIMIT),
    )(x, p["attn_ln_w"], p["attn_ln_b"],
      p["wq_t"], p["bq"], p["wk_t"], p["wv_t"], p["bv"])


def _attn_pass(x, q, k, v, p, n_head, *, q_tile, kv_tile):
    B, T, D = x.shape
    H = n_head
    hd = D // H
    TQ = _pick_tile(T, q_tile, 8)
    TKV = _pick_tile(T, kv_tile, 8)

    return pl.pallas_call(
        _flash_attn_kernel,
        out_shape=jax.ShapeDtypeStruct((B, T, D), x.dtype),
        grid=(B, T // TQ, T // TKV),
        in_specs=[
            pl.BlockSpec((1, H, TQ, hd), lambda b, qi, ki: (b, 0, qi, 0)),
            pl.BlockSpec((1, H, TKV, hd), lambda b, qi, ki: (b, 0, ki, 0)),
            pl.BlockSpec((1, H, TKV, hd), lambda b, qi, ki: (b, 0, ki, 0)),
            pl.BlockSpec((1, TQ, D), lambda b, qi, ki: (b, qi, 0)),
            pl.BlockSpec((D, D), lambda b, qi, ki: (0, 0)),       # Wo^T
            pl.BlockSpec((1, D), lambda b, qi, ki: (0, 0)),       # bo
        ],
        out_specs=pl.BlockSpec((1, TQ, D), lambda b, qi, ki: (b, qi, 0)),
        scratch_shapes=[
            pltpu.VMEM((H, TQ, 1), jnp.float32),   # running max
            pltpu.VMEM((H, TQ, 1), jnp.float32),   # running denom
            pltpu.VMEM((H, TQ, hd), jnp.float32),  # running numerator
        ],
        compiler_params=pltpu.CompilerParams(
            dimension_semantics=("parallel", "parallel", "arbitrary"),
            vmem_limit_bytes=_VMEM_LIMIT),
    )(q, k, v, x, p["wo_t"], p["bo"])


def _mlp_pass(x, p, *, q_tile, dm_tile):
    B, T, D = x.shape
    Dm = p["w1_t"].shape[1]
    TQ = _pick_tile(T, q_tile, 8)
    TDm = _pick_tile(Dm, dm_tile, 128)

    return pl.pallas_call(
        _mlp_kernel,
        out_shape=jax.ShapeDtypeStruct((B, T, D), x.dtype),
        grid=(B, T // TQ, Dm // TDm),
        in_specs=[
            pl.BlockSpec((1, TQ, D), lambda b, qi, mi: (b, qi, 0)),
            pl.BlockSpec((1, D), lambda b, qi, mi: (0, 0)),       # mlp_ln w
            pl.BlockSpec((1, D), lambda b, qi, mi: (0, 0)),       # mlp_ln b
            pl.BlockSpec((D, TDm), lambda b, qi, mi: (0, mi)),    # W1^T tile
            pl.BlockSpec((1, TDm), lambda b, qi, mi: (0, mi)),    # b1 tile
            pl.BlockSpec((TDm, D), lambda b, qi, mi: (mi, 0)),    # W2^T tile
            pl.BlockSpec((1, D), lambda b, qi, mi: (0, 0)),       # b2
        ],
        out_specs=pl.BlockSpec((1, TQ, D), lambda b, qi, mi: (b, qi, 0)),
        scratch_shapes=[
            pltpu.VMEM((TQ, D), jnp.bfloat16),     # cached LN(x) for all mi
            pltpu.VMEM((TQ, D), jnp.float32),      # second-matmul accumulator
        ],
        compiler_params=pltpu.CompilerParams(
            dimension_semantics=("parallel", "parallel", "arbitrary"),
            vmem_limit_bytes=_VMEM_LIMIT),
    )(x, p["mlp_ln_w"], p["mlp_ln_b"],
      p["w1_t"], p["b1"], p["w2_t"], p["b2"])


def residual_attention_block(x, prepared_params, n_head, *,
                             seq_tile=512, q_tile=256, kv_tile=512,
                             dm_tile=512):
    """x = x + attn(attn_ln(x)); x = x + mlp(mlp_ln(x))."""
    q, k, v = _qkv_pass(x, prepared_params, n_head, seq_tile=seq_tile)
    x = _attn_pass(x, q, k, v, prepared_params, n_head,
                   q_tile=q_tile, kv_tile=kv_tile)
    x = _mlp_pass(x, prepared_params, q_tile=q_tile, dm_tile=dm_tile)
    return x


# ----------------------------------------------------------------------------
# Pure-JAX reference (PyTorch semantics, f32 weights) for correctness check
# ----------------------------------------------------------------------------
def _ref_block(x, p, n_head):
    def ln(z, w, b):
        m = z.mean(-1, keepdims=True)
        v = ((z - m) ** 2).mean(-1, keepdims=True)
        return (z - m) / jnp.sqrt(v + 1e-5) * w + b

    B, T, D = x.shape
    hd = D // n_head
    scale = hd ** (-0.25)

    xn = ln(x, p["attn_ln_w"], p["attn_ln_b"])
    q = xn @ p["wq"].T + p["bq"]
    k = xn @ p["wk"].T
    v = xn @ p["wv"].T + p["bv"]
    q = q.reshape(B, T, n_head, hd).transpose(0, 2, 1, 3) * scale
    k = k.reshape(B, T, n_head, hd).transpose(0, 2, 3, 1) * scale
    v = v.reshape(B, T, n_head, hd).transpose(0, 2, 1, 3)
    qk = q @ k
    w = jax.nn.softmax(qk.astype(jnp.float32), axis=-1)
    wv = (w @ v).transpose(0, 2, 1, 3).reshape(B, T, D)
    x = x + (wv @ p["wo"].T + p["bo"])

    xn = ln(x, p["mlp_ln_w"], p["mlp_ln_b"])
    h = xn @ p["w1"].T + p["b1"]
    h = 0.5 * h * (1.0 + jax.lax.erf(h / jnp.sqrt(2.0)))
    return x + (h @ p["w2"].T + p["b2"])


# ----------------------------------------------------------------------------
# Main
# ----------------------------------------------------------------------------
if __name__ == "__main__":
    B, T, D, H = 2, 8, 32, 4            # batch, seq, n_state, n_head
    Dm = 4 * D                          # n_mlp

    key = jax.random.PRNGKey(0)
    ks = jax.random.split(key, 16)

    def init(k, shape, scale=0.05):
        return (scale * jax.random.normal(k, shape)).astype(jnp.float32)

    params = {
        "attn_ln_w": 1.0 + init(ks[12], (D,), 0.1),
        "attn_ln_b": init(ks[13], (D,), 0.1),
        "wq": init(ks[0], (D, D)), "bq": init(ks[1], (D,)),
        "wk": init(ks[2], (D, D)),                     # key: no bias
        "wv": init(ks[3], (D, D)), "bv": init(ks[4], (D,)),
        "wo": init(ks[5], (D, D)), "bo": init(ks[6], (D,)),
        "mlp_ln_w": 1.0 + init(ks[14], (D,), 0.1),
        "mlp_ln_b": init(ks[15], (D,), 0.1),
        "w1": init(ks[7], (Dm, D)), "b1": init(ks[8], (Dm,)),
        "w2": init(ks[9], (D, Dm)), "b2": init(ks[10], (D,)),
    }

    x = jax.random.normal(ks[11], (B, T, D), dtype=jnp.float32)

    prepared = prepare_params(params)                  # one-time transpose+bf16
    out = residual_attention_block(x, prepared, H)
    out = jax.block_until_ready(out)

    ref = _ref_block(x, params, H)
    # bf16 matmul operands (f32 accumulation) vs the f32 reference -> loose tol.
    np.testing.assert_allclose(np.asarray(out), np.asarray(ref),
                               rtol=2e-2, atol=2e-2)
    print("KERNEL_OK")
</pallas_src>

<mosaic_0001>
module attributes {stable_mosaic.version = 11 : i64} {
  func.func @_ln_qkv_kernel(%arg0: i32, %arg1: i32, %arg2: memref<1x8x32xf32, #tpu.memory_space<vmem>>, %arg3: memref<1x32xf32, #tpu.memory_space<vmem>>, %arg4: memref<1x32xf32, #tpu.memory_space<vmem>>, %arg5: memref<32x32xbf16, #tpu.memory_space<vmem>>, %arg6: memref<1x32xf32, #tpu.memory_space<vmem>>, %arg7: memref<32x32xbf16, #tpu.memory_space<vmem>>, %arg8: memref<32x32xbf16, #tpu.memory_space<vmem>>, %arg9: memref<1x32xf32, #tpu.memory_space<vmem>>, %arg10: memref<1x4x8x8xbf16, #tpu.memory_space<vmem>>, %arg11: memref<1x4x8x8xbf16, #tpu.memory_space<vmem>>, %arg12: memref<1x4x8x8xbf16, #tpu.memory_space<vmem>>) attributes {dimension_semantics = [#tpu.dimension_semantics<parallel>, #tpu.dimension_semantics<parallel>], iteration_bounds = array<i64: 2, 1>, scalar_prefetch = 0 : i64, scratch_operands = 0 : i64, tpu.core_type = #tpu.core_type<tc>, window_params = [{transform_indices = @transform_0, window_bounds = array<i64: 1, 8, 32>}, {pipeline_mode = #tpu.pipeline_mode<synchronous>, transform_indices = @transform_1, window_bounds = array<i64: 1, 32>}, {pipeline_mode = #tpu.pipeline_mode<synchronous>, transform_indices = @transform_2, window_bounds = array<i64: 1, 32>}, {pipeline_mode = #tpu.pipeline_mode<synchronous>, transform_indices = @transform_3, window_bounds = array<i64: 32, 32>}, {pipeline_mode = #tpu.pipeline_mode<synchronous>, transform_indices = @transform_4, window_bounds = array<i64: 1, 32>}, {pipeline_mode = #tpu.pipeline_mode<synchronous>, transform_indices = @transform_5, window_bounds = array<i64: 32, 32>}, {pipeline_mode = #tpu.pipeline_mode<synchronous>, transform_indices = @transform_6, window_bounds = array<i64: 32, 32>}, {pipeline_mode = #tpu.pipeline_mode<synchronous>, transform_indices = @transform_7, window_bounds = array<i64: 1, 32>}, {transform_indices = @transform_8, window_bounds = array<i64: 1, 4, 8, 8>}, {transform_indices = @transform_9, window_bounds = array<i64: 1, 4, 8, 8>}, {transform_indices = @transform_10, window_bounds = array<i64: 1, 4, 8, 8>}]} {
    %c0 = arith.constant 0 : index
    %c0_0 = arith.constant 0 : index
    %c0_1 = arith.constant 0 : index
    %0 = vector.load %arg2[%c0, %c0_0, %c0_1] : memref<1x8x32xf32, #tpu.memory_space<vmem>>, vector<1x8x32xf32>
    %1 = vector.shape_cast %0 : vector<1x8x32xf32> to vector<8x32xf32>
    %c0_2 = arith.constant 0 : index
    %c0_3 = arith.constant 0 : index
    %2 = vector.load %arg3[%c0_2, %c0_3] : memref<1x32xf32, #tpu.memory_space<vmem>>, vector<1x32xf32>
    %c0_4 = arith.constant 0 : index
    %c0_5 = arith.constant 0 : index
    %3 = vector.load %arg4[%c0_4, %c0_5] : memref<1x32xf32, #tpu.memory_space<vmem>>, vector<1x32xf32>
    %cst = arith.constant dense<0.000000e+00> : vector<8xf32>
    %4 = vector.multi_reduction <add>, %1, %cst [1] : vector<8x32xf32> to vector<8xf32>
    %5 = vector.shape_cast %4 : vector<8xf32> to vector<8x1xf32>
    %cst_6 = arith.constant 3.200000e+01 : f32
    %6 = vector.broadcast %cst_6 : f32 to vector<8x1xf32>
    %7 = arith.divf %5, %6 : vector<8x1xf32>
    %8 = vector.broadcast %7 : vector<8x1xf32> to vector<8x32xf32>
    %9 = arith.subf %1, %8 : vector<8x32xf32>
    %10 = arith.mulf %9, %9 : vector<8x32xf32>
    %cst_7 = arith.constant dense<0.000000e+00> : vector<8xf32>
    %11 = vector.multi_reduction <add>, %10, %cst_7 [1] : vector<8x32xf32> to vector<8xf32>
    %12 = vector.shape_cast %11 : vector<8xf32> to vector<8x1xf32>
    %cst_8 = arith.constant 3.200000e+01 : f32
    %13 = vector.broadcast %cst_8 : f32 to vector<8x1xf32>
    %14 = arith.divf %12, %13 : vector<8x1xf32>
    %15 = vector.broadcast %7 : vector<8x1xf32> to vector<8x32xf32>
    %16 = arith.subf %1, %15 : vector<8x32xf32>
    %cst_9 = arith.constant 9.99999974E-6 : f32
    %17 = vector.broadcast %cst_9 : f32 to vector<8x1xf32>
    %18 = arith.addf %14, %17 : vector<8x1xf32>
    %19 = math.rsqrt %18 : vector<8x1xf32>
    %20 = vector.broadcast %19 : vector<8x1xf32> to vector<8x32xf32>
    %21 = arith.mulf %16, %20 : vector<8x32xf32>
    %22 = vector.broadcast %2 : vector<1x32xf32> to vector<8x32xf32>
    %23 = arith.mulf %21, %22 : vector<8x32xf32>
    %24 = vector.broadcast %3 : vector<1x32xf32> to vector<8x32xf32>
    %25 = arith.addf %23, %24 : vector<8x32xf32>
    %26 = arith.truncf %25 : vector<8x32xf32> to vector<8x32xbf16>
    %c0_10 = arith.constant 0 : index
    %c0_11 = arith.constant 0 : index
    %27 = vector.load %arg5[%c0_10, %c0_11] : memref<32x32xbf16, #tpu.memory_space<vmem>>, vector<32x32xbf16>
    %cst_12 = arith.constant dense<0.000000e+00> : vector<8x32xf32>
    %28 = tpu.matmul %26, %27, %cst_12 {dimension_numbers = #tpu.dot_dimension_numbers<[1], [0], [0], [1], [0, 0, 1, 1], [], []>} : vector<8x32xbf16>, vector<32x32xbf16>, vector<8x32xf32> -> vector<8x32xf32>
    %c0_13 = arith.constant 0 : index
    %c0_14 = arith.constant 0 : index
    %29 = vector.load %arg6[%c0_13, %c0_14] : memref<1x32xf32, #tpu.memory_space<vmem>>, vector<1x32xf32>
    %30 = vector.broadcast %29 : vector<1x32xf32> to vector<8x32xf32>
    %31 = arith.addf %28, %30 : vector<8x32xf32>
    %c0_15 = arith.constant 0 : index
    %c0_16 = arith.constant 0 : index
    %32 = vector.load %arg7[%c0_15, %c0_16] : memref<32x32xbf16, #tpu.memory_space<vmem>>, vector<32x32xbf16>
    %cst_17 = arith.constant dense<0.000000e+00> : vector<8x32xf32>
    %33 = tpu.matmul %26, %32, %cst_17 {dimension_numbers = #tpu.dot_dimension_numbers<[1], [0], [0], [1], [0, 0, 1, 1], [], []>} : vector<8x32xbf16>, vector<32x32xbf16>, vector<8x32xf32> -> vector<8x32xf32>
    %c0_18 = arith.constant 0 : index
    %c0_19 = arith.constant 0 : index
    %34 = vector.load %arg8[%c0_18, %c0_19] : memref<32x32xbf16, #tpu.memory_space<vmem>>, vector<32x32xbf16>
    %cst_20 = arith.constant dense<0.000000e+00> : vector<8x32xf32>
    %35 = tpu.matmul %26, %34, %cst_20 {dimension_numbers = #tpu.dot_dimension_numbers<[1], [0], [0], [1], [0, 0, 1, 1], [], []>} : vector<8x32xbf16>, vector<32x32xbf16>, vector<8x32xf32> -> vector<8x32xf32>
    %c0_21 = arith.constant 0 : index
    %c0_22 = arith.constant 0 : index
    %36 = vector.load %arg9[%c0_21, %c0_22] : memref<1x32xf32, #tpu.memory_space<vmem>>, vector<1x32xf32>
    %37 = vector.broadcast %36 : vector<1x32xf32> to vector<8x32xf32>
    %38 = arith.addf %35, %37 : vector<8x32xf32>
    %cst_23 = arith.constant 0.594603539 : f32
    %39 = vector.broadcast %cst_23 : f32 to vector<8x32xf32>
    %40 = arith.mulf %31, %39 : vector<8x32xf32>
    %41 = arith.truncf %40 : vector<8x32xf32> to vector<8x32xbf16>
    %cst_24 = arith.constant 0.594603539 : f32
    %42 = vector.broadcast %cst_24 : f32 to vector<8x32xf32>
    %43 = arith.mulf %33, %42 : vector<8x32xf32>
    %44 = arith.truncf %43 : vector<8x32xf32> to vector<8x32xbf16>
    %45 = arith.truncf %38 : vector<8x32xf32> to vector<8x32xbf16>
    %46 = vector.extract_strided_slice %41 {offsets = [0, 0], sizes = [8, 8], strides = [1, 1]} : vector<8x32xbf16> to vector<8x8xbf16>
    %c0_25 = arith.constant 0 : index
    %c0_26 = arith.constant 0 : index
    %c0_27 = arith.constant 0 : index
    %c0_28 = arith.constant 0 : index
    %47 = vector.load %arg10[%c0_25, %c0_26, %c0_27, %c0_28] : memref<1x4x8x8xbf16, #tpu.memory_space<vmem>>, vector<1x1x8x8xbf16>
    %48 = vector.shape_cast %47 : vector<1x1x8x8xbf16> to vector<8x8xbf16>
    %49 = vector.shape_cast %46 : vector<8x8xbf16> to vector<1x1x8x8xbf16>
    tpu.vector_store %arg10[%c0_25, %c0_26, %c0_27, %c0_28], %49 {strides = array<i32>} : memref<1x4x8x8xbf16, #tpu.memory_space<vmem>>, vector<1x1x8x8xbf16>,
    %50 = vector.extract_strided_slice %44 {offsets = [0, 0], sizes = [8, 8], strides = [1, 1]} : vector<8x32xbf16> to vector<8x8xbf16>
    %c0_29 = arith.constant 0 : index
    %c0_30 = arith.constant 0 : index
    %c0_31 = arith.constant 0 : index
    %c0_32 = arith.constant 0 : index
    %51 = vector.load %arg11[%c0_29, %c0_30, %c0_31, %c0_32] : memref<1x4x8x8xbf16, #tpu.memory_space<vmem>>, vector<1x1x8x8xbf16>
    %52 = vector.shape_cast %51 : vector<1x1x8x8xbf16> to vector<8x8xbf16>
    %53 = vector.shape_cast %50 : vector<8x8xbf16> to vector<1x1x8x8xbf16>
    tpu.vector_store %arg11[%c0_29, %c0_30, %c0_31, %c0_32], %53 {strides = array<i32>} : memref<1x4x8x8xbf16, #tpu.memory_space<vmem>>, vector<1x1x8x8xbf16>,
    %54 = vector.extract_strided_slice %45 {offsets = [0, 0], sizes = [8, 8], strides = [1, 1]} : vector<8x32xbf16> to vector<8x8xbf16>
    %c0_33 = arith.constant 0 : index
    %c0_34 = arith.constant 0 : index
    %c0_35 = arith.constant 0 : index
    %c0_36 = arith.constant 0 : index
    %55 = vector.load %arg12[%c0_33, %c0_34, %c0_35, %c0_36] : memref<1x4x8x8xbf16, #tpu.memory_space<vmem>>, vector<1x1x8x8xbf16>
    %56 = vector.shape_cast %55 : vector<1x1x8x8xbf16> to vector<8x8xbf16>
    %57 = vector.shape_cast %54 : vector<8x8xbf16> to vector<1x1x8x8xbf16>
    tpu.vector_store %arg12[%c0_33, %c0_34, %c0_35, %c0_36], %57 {strides = array<i32>} : memref<1x4x8x8xbf16, #tpu.memory_space<vmem>>, vector<1x1x8x8xbf16>,
    %58 = vector.extract_strided_slice %41 {offsets = [0, 8], sizes = [8, 8], strides = [1, 1]} : vector<8x32xbf16> to vector<8x8xbf16>
    %c0_37 = arith.constant 0 : index
    %c1 = arith.constant 1 : index
    %c0_38 = arith.constant 0 : index
    %c0_39 = arith.constant 0 : index
    %59 = vector.load %arg10[%c0_37, %c1, %c0_38, %c0_39] : memref<1x4x8x8xbf16, #tpu.memory_space<vmem>>, vector<1x1x8x8xbf16>
    %60 = vector.shape_cast %59 : vector<1x1x8x8xbf16> to vector<8x8xbf16>
    %61 = vector.shape_cast %58 : vector<8x8xbf16> to vector<1x1x8x8xbf16>
    tpu.vector_store %arg10[%c0_37, %c1, %c0_38, %c0_39], %61 {strides = array<i32>} : memref<1x4x8x8xbf16, #tpu.memory_space<vmem>>, vector<1x1x8x8xbf16>,
    %62 = vector.extract_strided_slice %44 {offsets = [0, 8], sizes = [8, 8], strides = [1, 1]} : vector<8x32xbf16> to vector<8x8xbf16>
    %c0_40 = arith.constant 0 : index
    %c1_41 = arith.constant 1 : index
    %c0_42 = arith.constant 0 : index
    %c0_43 = arith.constant 0 : index
    %63 = vector.load %arg11[%c0_40, %c1_41, %c0_42, %c0_43] : memref<1x4x8x8xbf16, #tpu.memory_space<vmem>>, vector<1x1x8x8xbf16>
    %64 = vector.shape_cast %63 : vector<1x1x8x8xbf16> to vector<8x8xbf16>
    %65 = vector.shape_cast %62 : vector<8x8xbf16> to vector<1x1x8x8xbf16>
    tpu.vector_store %arg11[%c0_40, %c1_41, %c0_42, %c0_43], %65 {strides = array<i32>} : memref<1x4x8x8xbf16, #tpu.memory_space<vmem>>, vector<1x1x8x8xbf16>,
    %66 = vector.extract_strided_slice %45 {offsets = [0, 8], sizes = [8, 8], strides = [1, 1]} : vector<8x32xbf16> to vector<8x8xbf16>
    %c0_44 = arith.constant 0 : index
    %c1_45 = arith.constant 1 : index
    %c0_46 = arith.constant 0 : index
    %c0_47 = arith.constant 0 : index
    %67 = vector.load %arg12[%c0_44, %c1_45, %c0_46, %c0_47] : memref<1x4x8x8xbf16, #tpu.memory_space<vmem>>, vector<1x1x8x8xbf16>
    %68 = vector.shape_cast %67 : vector<1x1x8x8xbf16> to vector<8x8xbf16>
    %69 = vector.shape_cast %66 : vector<8x8xbf16> to vector<1x1x8x8xbf16>
    tpu.vector_store %arg12[%c0_44, %c1_45, %c0_46, %c0_47], %69 {strides = array<i32>} : memref<1x4x8x8xbf16, #tpu.memory_space<vmem>>, vector<1x1x8x8xbf16>,
    %70 = vector.extract_strided_slice %41 {offsets = [0, 16], sizes = [8, 8], strides = [1, 1]} : vector<8x32xbf16> to vector<8x8xbf16>
    %c0_48 = arith.constant 0 : index
    %c2 = arith.constant 2 : index
    %c0_49 = arith.constant 0 : index
    %c0_50 = arith.constant 0 : index
    %71 = vector.load %arg10[%c0_48, %c2, %c0_49, %c0_50] : memref<1x4x8x8xbf16, #tpu.memory_space<vmem>>, vector<1x1x8x8xbf16>
    %72 = vector.shape_cast %71 : vector<1x1x8x8xbf16> to vector<8x8xbf16>
    %73 = vector.shape_cast %70 : vector<8x8xbf16> to vector<1x1x8x8xbf16>
    tpu.vector_store %arg10[%c0_48, %c2, %c0_49, %c0_50], %73 {strides = array<i32>} : memref<1x4x8x8xbf16, #tpu.memory_space<vmem>>, vector<1x1x8x8xbf16>,
    %74 = vector.extract_strided_slice %44 {offsets = [0, 16], sizes = [8, 8], strides = [1, 1]} : vector<8x32xbf16> to vector<8x8xbf16>
    %c0_51 = arith.constant 0 : index
    %c2_52 = arith.constant 2 : index
    %c0_53 = arith.constant 0 : index
    %c0_54 = arith.constant 0 : index
    %75 = vector.load %arg11[%c0_51, %c2_52, %c0_53, %c0_54] : memref<1x4x8x8xbf16, #tpu.memory_space<vmem>>, vector<1x1x8x8xbf16>
    %76 = vector.shape_cast %75 : vector<1x1x8x8xbf16> to vector<8x8xbf16>
    %77 = vector.shape_cast %74 : vector<8x8xbf16> to vector<1x1x8x8xbf16>
    tpu.vector_store %arg11[%c0_51, %c2_52, %c0_53, %c0_54], %77 {strides = array<i32>} : memref<1x4x8x8xbf16, #tpu.memory_space<vmem>>, vector<1x1x8x8xbf16>,
    %78 = vector.extract_strided_slice %45 {offsets = [0, 16], sizes = [8, 8], strides = [1, 1]} : vector<8x32xbf16> to vector<8x8xbf16>
    %c0_55 = arith.constant 0 : index
    %c2_56 = arith.constant 2 : index
    %c0_57 = arith.constant 0 : index
    %c0_58 = arith.constant 0 : index
    %79 = vector.load %arg12[%c0_55, %c2_56, %c0_57, %c0_58] : memref<1x4x8x8xbf16, #tpu.memory_space<vmem>>, vector<1x1x8x8xbf16>
    %80 = vector.shape_cast %79 : vector<1x1x8x8xbf16> to vector<8x8xbf16>
    %81 = vector.shape_cast %78 : vector<8x8xbf16> to vector<1x1x8x8xbf16>
    tpu.vector_store %arg12[%c0_55, %c2_56, %c0_57, %c0_58], %81 {strides = array<i32>} : memref<1x4x8x8xbf16, #tpu.memory_space<vmem>>, vector<1x1x8x8xbf16>,
    %82 = vector.extract_strided_slice %41 {offsets = [0, 24], sizes = [8, 8], strides = [1, 1]} : vector<8x32xbf16> to vector<8x8xbf16>
    %c0_59 = arith.constant 0 : index
    %c3 = arith.constant 3 : index
    %c0_60 = arith.constant 0 : index
    %c0_61 = arith.constant 0 : index
    %83 = vector.load %arg10[%c0_59, %c3, %c0_60, %c0_61] : memref<1x4x8x8xbf16, #tpu.memory_space<vmem>>, vector<1x1x8x8xbf16>
    %84 = vector.shape_cast %83 : vector<1x1x8x8xbf16> to vector<8x8xbf16>
    %85 = vector.shape_cast %82 : vector<8x8xbf16> to vector<1x1x8x8xbf16>
    tpu.vector_store %arg10[%c0_59, %c3, %c0_60, %c0_61], %85 {strides = array<i32>} : memref<1x4x8x8xbf16, #tpu.memory_space<vmem>>, vector<1x1x8x8xbf16>,
    %86 = vector.extract_strided_slice %44 {offsets = [0, 24], sizes = [8, 8], strides = [1, 1]} : vector<8x32xbf16> to vector<8x8xbf16>
    %c0_62 = arith.constant 0 : index
    %c3_63 = arith.constant 3 : index
    %c0_64 = arith.constant 0 : index
    %c0_65 = arith.constant 0 : index
    %87 = vector.load %arg11[%c0_62, %c3_63, %c0_64, %c0_65] : memref<1x4x8x8xbf16, #tpu.memory_space<vmem>>, vector<1x1x8x8xbf16>
    %88 = vector.shape_cast %87 : vector<1x1x8x8xbf16> to vector<8x8xbf16>
    %89 = vector.shape_cast %86 : vector<8x8xbf16> to vector<1x1x8x8xbf16>
    tpu.vector_store %arg11[%c0_62, %c3_63, %c0_64, %c0_65], %89 {strides = array<i32>} : memref<1x4x8x8xbf16, #tpu.memory_space<vmem>>, vector<1x1x8x8xbf16>,
    %90 = vector.extract_strided_slice %45 {offsets = [0, 24], sizes = [8, 8], strides = [1, 1]} : vector<8x32xbf16> to vector<8x8xbf16>
    %c0_66 = arith.constant 0 : index
    %c3_67 = arith.constant 3 : index
    %c0_68 = arith.constant 0 : index
    %c0_69 = arith.constant 0 : index
    %91 = vector.load %arg12[%c0_66, %c3_67, %c0_68, %c0_69] : memref<1x4x8x8xbf16, #tpu.memory_space<vmem>>, vector<1x1x8x8xbf16>
    %92 = vector.shape_cast %91 : vector<1x1x8x8xbf16> to vector<8x8xbf16>
    %93 = vector.shape_cast %90 : vector<8x8xbf16> to vector<1x1x8x8xbf16>
    tpu.vector_store %arg12[%c0_66, %c3_67, %c0_68, %c0_69], %93 {strides = array<i32>} : memref<1x4x8x8xbf16, #tpu.memory_space<vmem>>, vector<1x1x8x8xbf16>,
    return
  }
  func.func @transform_0(%arg0: i32, %arg1: i32) -> (i32, i32, i32) {
    %c0_i32 = arith.constant 0 : i32
    %c0_i32_0 = arith.constant 0 : i32
    return %arg0, %arg1, %c0_i32 : i32, i32, i32
  }
  func.func @transform_1(%arg0: i32, %arg1: i32) -> (i32, i32) {
    %c0_i32 = arith.constant 0 : i32
    %c0_i32_0 = arith.constant 0 : i32
    %c0_i32_1 = arith.constant 0 : i32
    return %c0_i32, %c0_i32_0 : i32, i32
  }
  func.func @transform_2(%arg0: i32, %arg1: i32) -> (i32, i32) {
    %c0_i32 = arith.constant 0 : i32
    %c0_i32_0 = arith.constant 0 : i32
    %c0_i32_1 = arith.constant 0 : i32
    return %c0_i32, %c0_i32_0 : i32, i32
  }
  func.func @transform_3(%arg0: i32, %arg1: i32) -> (i32, i32) {
    %c0_i32 = arith.constant 0 : i32
    %c0_i32_0 = arith.constant 0 : i32
    %c0_i32_1 = arith.constant 0 : i32
    return %c0_i32, %c0_i32_0 : i32, i32
  }
  func.func @transform_4(%arg0: i32, %arg1: i32) -> (i32, i32) {
    %c0_i32 = arith.constant 0 : i32
    %c0_i32_0 = arith.constant 0 : i32
    %c0_i32_1 = arith.constant 0 : i32
    return %c0_i32, %c0_i32_0 : i32, i32
  }
  func.func @transform_5(%arg0: i32, %arg1: i32) -> (i32, i32) {
    %c0_i32 = arith.constant 0 : i32
    %c0_i32_0 = arith.constant 0 : i32
    %c0_i32_1 = arith.constant 0 : i32
    return %c0_i32, %c0_i32_0 : i32, i32
  }
  func.func @transform_6(%arg0: i32, %arg1: i32) -> (i32, i32) {
    %c0_i32 = arith.constant 0 : i32
    %c0_i32_0 = arith.constant 0 : i32
    %c0_i32_1 = arith.constant 0 : i32
    return %c0_i32, %c0_i32_0 : i32, i32
  }
  func.func @transform_7(%arg0: i32, %arg1: i32) -> (i32, i32) {
    %c0_i32 = arith.constant 0 : i32
    %c0_i32_0 = arith.constant 0 : i32
    %c0_i32_1 = arith.constant 0 : i32
    return %c0_i32, %c0_i32_0 : i32, i32
  }
  func.func @transform_8(%arg0: i32, %arg1: i32) -> (i32, i32, i32, i32) {
    %c0_i32 = arith.constant 0 : i32
    %c0_i32_0 = arith.constant 0 : i32
    %c0_i32_1 = arith.constant 0 : i32
    return %arg0, %c0_i32, %arg1, %c0_i32_0 : i32, i32, i32, i32
  }
  func.func @transform_9(%arg0: i32, %arg1: i32) -> (i32, i32, i32, i32) {
    %c0_i32 = arith.constant 0 : i32
    %c0_i32_0 = arith.constant 0 : i32
    %c0_i32_1 = arith.constant 0 : i32
    return %arg0, %c0_i32, %arg1, %c0_i32_0 : i32, i32, i32, i32
  }
  func.func @transform_10(%arg0: i32, %arg1: i32) -> (i32, i32, i32, i32) {
    %c0_i32 = arith.constant 0 : i32
    %c0_i32_0 = arith.constant 0 : i32
    %c0_i32_1 = arith.constant 0 : i32
    return %arg0, %c0_i32, %arg1, %c0_i32_0 : i32, i32, i32, i32
  }
}

</mosaic_0001>

<llo_original>
// kernel: tpu_custom_call.1
$region0: #{tpu_custom_call.1}
  #allocation0 [shape = 'u32[]', space=smem, size = 0x4, offset = 0x4, fixed_abs, tag = 'smem constant byte address 0x4 - core index']
  #allocation1 [shape = 'u32[72,128]{1,0:T(1,128)}', space=vmem, size = 0x9000, scoped, tag = 'internal scratch']
  %s0 = inlined_call_operand.hbm [shape: f32[2,8,32], index: 0, kind: input, shape index: {}]
  %s1 = inlined_call_operand.hbm [shape: f32[1,32], index: 1, kind: input, shape index: {}]
  %s2 = inlined_call_operand.vmem [shape: f32[1,32], index: 2, kind: input, shape index: {}]
  %s3 = inlined_call_operand.hbm [shape: bf16[32,32], index: 3, kind: input, shape index: {}]
  %s4 = inlined_call_operand.vmem [shape: f32[1,32], index: 4, kind: input, shape index: {}]
  %s5 = inlined_call_operand.hbm [shape: bf16[32,32], index: 5, kind: input, shape index: {}]
  %s6 = inlined_call_operand.hbm [shape: bf16[32,32], index: 6, kind: input, shape index: {}]
  %s7 = inlined_call_operand.vmem [shape: f32[1,32], index: 7, kind: input, shape index: {}]
  %s8 = inlined_call_operand.hbm [shape: bf16[2,4,8,8], index: 8, kind: output, shape index: {0}]
  %s9 = inlined_call_operand.hbm [shape: bf16[2,4,8,8], index: 9, kind: output, shape index: {1}]
  %s10 = inlined_call_operand.hbm [shape: bf16[2,4,8,8], index: 10, kind: output, shape index: {2}]
  %11 = xla_tuple %s8, %s9, %s10
  %s12 = sld [smem:[#allocation0]]
  $region101: #{tpu_custom_call.1} parent=0
    _
  %s14 = ssub.s32 1, %s12
  %s15 = scalar_select 0, %s14, %s12
  $region1: #{tpu_custom_call.1} parent=0
    #allocation2 [shape = 'u8[8192]{0}', space=vmem, size = 0x2000, scoped, tag = 'input window, operand 0']
    #allocation3 [shape = 's32[2]{0}', space=sflag, size = 0x8, scoped, tag = 'scoped memory for tpu_custom_call.1']
    #allocation4 [shape = 's32[2]{0}', space=sflag, size = 0x8, scoped, tag = 'scoped memory for tpu_custom_call.1']
    #allocation5 [shape = 'u8[512]{0}', space=vmem, size = 0x400, scoped, tag = 'input window, operand 1, single buffered']
    #allocation6 [shape = 's32[1]{0}', space=sflag, size = 0x4, scoped, tag = 'scoped memory for tpu_custom_call.1']
    #allocation7 [shape = 'u8[8192]{0}', space=vmem, size = 0x2000, scoped, tag = 'input window, operand 3, single buffered']
    #allocation8 [shape = 'u8[8192]{0}', space=vmem, size = 0x2000, scoped, tag = 'input window, operand 5, single buffered']
    #allocation9 [shape = 's32[1]{0}', space=sflag, size = 0x4, scoped, tag = 'scoped memory for tpu_custom_call.1']
    #allocation10 [shape = 'u8[8192]{0}', space=vmem, size = 0x2000, scoped, tag = 'input window, operand 6, single buffered']
    #allocation11 [shape = 'u8[16384]{0}', space=vmem, size = 0x4000, scoped, tag = 'output window, operand 0']
    #allocation12 [shape = 'u8[16384]{0}', space=vmem, size = 0x4000, scoped, tag = 'output window, operand 1']
    #allocation13 [shape = 's32[2]{0}', space=sflag, size = 0x8, scoped, tag = 'scoped memory for tpu_custom_call.1']
    #allocation14 [shape = 'u8[16384]{0}', space=vmem, size = 0x4000, scoped, tag = 'output window, operand 2']
    %16 = vsyncpa [#allocation3], 0
    %s17 = scalar_lea.sflag [#allocation3], 1
    %18 = vsyncpa %s17, 0
    %19 = vsyncpa [#allocation6], 0
    %20 = vsyncpa [#allocation9], 0
    %21 = vsyncpa [#allocation4], 0
    %s22 = scalar_lea.sflag [#allocation4], 1
    %23 = vsyncpa %s22, 0
    %24 = vsyncpa [#allocation13], 0
    %s25 = scalar_lea.sflag [#allocation13], 1
    %26 = vsyncpa %s25, 0
    loop: start=0, step=1, limit=4
    $region2: #{tpu_custom_call.1} parent=1 // loop_pre_header
      _
    $region3: #{tpu_custom_call.1} parent=1 // loop_header
      %s28 = sphi 0, %s32
      %p29 = scmp.ge.s32.totalorder %s28, 4
      %s35 = sphi 0, %s47
      %s36 = sphi 0, %s43
      %s37 = sphi 0, %s35
      %s38 = sphi 0, %s36
      %s39 = sphi 0, %s37
      %s40 = sphi 0, %s38
      %s52 = sphi 0, %s54
      %s55 = sphi 0, %s52
      %s56 = sphi 0, %s55
      %s72 = sphi 0, %s56
      %s76 = sphi 0, %s76
      %s78 = sphi 0, %s76
      %s79 = sphi 0, %s78
      %s93 = sphi 0, %s79
      %s97 = sphi 0, %s97
      %s99 = sphi 0, %s97
      %s100 = sphi 0, %s99
      %s114 = sphi 0, %s100
      %s118 = sphi 0, %s118
      %s120 = sphi 0, %s118
      %s121 = sphi 0, %s120
      %s135 = sphi 0, %s121
      %s139 = sphi 0, %s139
      %s141 = sphi 0, %s139
      %s142 = sphi 0, %s141
      %s156 = sphi 0, %s142
      %s160 = sphi 0, %s160
      %s162 = sphi 0, %s160
      %s163 = sphi 0, %s162
      %s177 = sphi 0, %s163
      %s181 = sphi 0, %s181
      %s183 = sphi 0, %s181
      %s184 = sphi 0, %s183
      %s198 = sphi 0, %s184
      %s202 = sphi 0, %s202
      %s204 = sphi 0, %s202
      %s205 = sphi 0, %s204
      %s219 = sphi 0, %s205
      %s227 = sphi 0, %s229
      %s230 = sphi 0, %s227
      %s231 = sphi 0, %s230
      %s247 = sphi 0, %s231
      %s255 = sphi 0, %s257
      %s258 = sphi 0, %s255
      %s259 = sphi 0, %s258
      %s275 = sphi 0, %s259
      %s283 = sphi 0, %s285
      %s286 = sphi 0, %s283
      %s287 = sphi 0, %s286
      %s303 = sphi 0, %s287
    $region4: #{tpu_custom_call.1} parent=1 // loop_header_branch
      %31 = sbr.rel (%p29) target = $region8
    $region5: #{tpu_custom_call.1} parent=1 // loop_body
      %s33 = ssub.s32 %s28, 1
      %s34 = ssub.s32 %s28, 2
      %s41 = sadd.s32 1, %s36
      %p42 = scmp.ge.s32.totalorder %s41, 1
      %s43 = scalar_select %p42, 0, %s41
      %s44 = sadd.s32 1, %s35
      %s45 = scalar_select %p42, %s44, %s35
      %p46 = scmp.ge.s32.totalorder %s45, 2
      %s47 = scalar_select %p46, 0, %s45
      %s48 = ssub.s32 %s35, %s47
      %s49 = ssub.s32 %s36, %s43
      %s50 = sor.u32 %s48, %s49
      %p51 = scmp.eq.s32.totalorder %s50, 0
      %s53 = sadd.s32 %s52, 1
      %s54 = scalar_select %p51, %s52, %s53
      %p57 = pneg %p51
      %p58 = scmp.eq.s32.totalorder %s28, 1
      %p59 = por %p57, %p58
      %p60 = scmp.ne.s32.totalorder %s52, %s55
      %p61 = scmp.eq.s32.totalorder %s28, 0
      %p62 = por %p60, %p61
      %p63 = scmp.ne.s32.totalorder %s52, %s55
      %p64 = scmp.eq.s32.totalorder %s33, 1
      %p65 = por %p63, %p64
      %p66 = scmp.ne.s32.totalorder %s55, %s56
      %p67 = scmp.eq.s32.totalorder %s33, 0
      %p68 = por %p66, %p67
      %p69 = scmp.ne.s32.totalorder %s55, %s56
      %p70 = scmp.eq.s32.totalorder %s34, 1
      %p71 = por %p69, %p70
      %p73 = scmp.ne.s32.totalorder %s56, %s72
      %p74 = scmp.eq.s32.totalorder %s34, 0
      %p75 = por %p73, %p74
      %s77 = sadd.s32 %s76, 1
      %p80 = scmp.eq.s32.totalorder %s28, 1
      %p81 = scmp.ne.s32.totalorder %s76, %s78
      %p82 = scmp.eq.s32.totalorder %s28, 0
      %p83 = por %p81, %p82
      %p84 = scmp.ne.s32.totalorder %s76, %s78
      %p85 = scmp.eq.s32.totalorder %s33, 1
      %p86 = por %p84, %p85
      %p87 = scmp.ne.s32.totalorder %s78, %s79
      %p88 = scmp.eq.s32.totalorder %s33, 0
      %p89 = por %p87, %p88
      %p90 = scmp.ne.s32.totalorder %s78, %s79
      %p91 = scmp.eq.s32.totalorder %s34, 1
      %p92 = por %p90, %p91
      %p94 = scmp.ne.s32.totalorder %s79, %s93
      %p95 = scmp.eq.s32.totalorder %s34, 0
      %p96 = por %p94, %p95
      %s98 = sadd.s32 %s97, 1
      %p101 = scmp.eq.s32.totalorder %s28, 1
      %p102 = scmp.ne.s32.totalorder %s97, %s99
      %p103 = scmp.eq.s32.totalorder %s28, 0
      %p104 = por %p102, %p103
      %p105 = scmp.ne.s32.totalorder %s97, %s99
      %p106 = scmp.eq.s32.totalorder %s33, 1
      %p107 = por %p105, %p106
      %p108 = scmp.ne.s32.totalorder %s99, %s100
      %p109 = scmp.eq.s32.totalorder %s33, 0
      %p110 = por %p108, %p109
      %p111 = scmp.ne.s32.totalorder %s99, %s100
      %p112 = scmp.eq.s32.totalorder %s34, 1
      %p113 = por %p111, %p112
      %p115 = scmp.ne.s32.totalorder %s100, %s114
      %p116 = scmp.eq.s32.totalorder %s34, 0
      %p117 = por %p115, %p116
      %s119 = sadd.s32 %s118, 1
      %p122 = scmp.eq.s32.totalorder %s28, 1
      %p123 = scmp.ne.s32.totalorder %s118, %s120
      %p124 = scmp.eq.s32.totalorder %s28, 0
      %p125 = por %p123, %p124
      %p126 = scmp.ne.s32.totalorder %s118, %s120
      %p127 = scmp.eq.s32.totalorder %s33, 1
      %p128 = por %p126, %p127
      %p129 = scmp.ne.s32.totalorder %s120, %s121
      %p130 = scmp.eq.s32.totalorder %s33, 0
      %p131 = por %p129, %p130
      %p132 = scmp.ne.s32.totalorder %s120, %s121
      %p133 = scmp.eq.s32.totalorder %s34, 1
      %p134 = por %p132, %p133
      %p136 = scmp.ne.s32.totalorder %s121, %s135
      %p137 = scmp.eq.s32.totalorder %s34, 0
      %p138 = por %p136, %p137
      %s140 = sadd.s32 %s139, 1
      %p143 = scmp.eq.s32.totalorder %s28, 1
      %p144 = scmp.ne.s32.totalorder %s139, %s141
      %p145 = scmp.eq.s32.totalorder %s28, 0
      %p146 = por %p144, %p145
      %p147 = scmp.ne.s32.totalorder %s139, %s141
      %p148 = scmp.eq.s32.totalorder %s33, 1
      %p149 = por %p147, %p148
      %p150 = scmp.ne.s32.totalorder %s141, %s142
      %p151 = scmp.eq.s32.totalorder %s33, 0
      %p152 = por %p150, %p151
      %p153 = scmp.ne.s32.totalorder %s141, %s142
      %p154 = scmp.eq.s32.totalorder %s34, 1
      %p155 = por %p153, %p154
      %p157 = scmp.ne.s32.totalorder %s142, %s156
      %p158 = scmp.eq.s32.totalorder %s34, 0
      %p159 = por %p157, %p158
      %s161 = sadd.s32 %s160, 1
      %p164 = scmp.eq.s32.totalorder %s28, 1
      %p165 = scmp.ne.s32.totalorder %s160, %s162
      %p166 = scmp.eq.s32.totalorder %s28, 0
      %p167 = por %p165, %p166
      %p168 = scmp.ne.s32.totalorder %s160, %s162
      %p169 = scmp.eq.s32.totalorder %s33, 1
      %p170 = por %p168, %p169
      %p171 = scmp.ne.s32.totalorder %s162, %s163
      %p172 = scmp.eq.s32.totalorder %s33, 0
      %p173 = por %p171, %p172
      %p174 = scmp.ne.s32.totalorder %s162, %s163
      %p175 = scmp.eq.s32.totalorder %s34, 1
      %p176 = por %p174, %p175
      %p178 = scmp.ne.s32.totalorder %s163, %s177
      %p179 = scmp.eq.s32.totalorder %s34, 0
      %p180 = por %p178, %p179
      %s182 = sadd.s32 %s181, 1
      %p185 = scmp.eq.s32.totalorder %s28, 1
      %p186 = scmp.ne.s32.totalorder %s181, %s183
      %p187 = scmp.eq.s32.totalorder %s28, 0
      %p188 = por %p186, %p187
      %p189 = scmp.ne.s32.totalorder %s181, %s183
      %p190 = scmp.eq.s32.totalorder %s33, 1
      %p191 = por %p189, %p190
      %p192 = scmp.ne.s32.totalorder %s183, %s184
      %p193 = scmp.eq.s32.totalorder %s33, 0
      %p194 = por %p192, %p193
      %p195 = scmp.ne.s32.totalorder %s183, %s184
      %p196 = scmp.eq.s32.totalorder %s34, 1
      %p197 = por %p195, %p196
      %p199 = scmp.ne.s32.totalorder %s184, %s198
      %p200 = scmp.eq.s32.totalorder %s34, 0
      %p201 = por %p199, %p200
      %s203 = sadd.s32 %s202, 1
      %p206 = scmp.eq.s32.totalorder %s28, 1
      %p207 = scmp.ne.s32.totalorder %s202, %s204
      %p208 = scmp.eq.s32.totalorder %s28, 0
      %p209 = por %p207, %p208
      %p210 = scmp.ne.s32.totalorder %s202, %s204
      %p211 = scmp.eq.s32.totalorder %s33, 1
      %p212 = por %p210, %p211
      %p213 = scmp.ne.s32.totalorder %s204, %s205
      %p214 = scmp.eq.s32.totalorder %s33, 0
      %p215 = por %p213, %p214
      %p216 = scmp.ne.s32.totalorder %s204, %s205
      %p217 = scmp.eq.s32.totalorder %s34, 1
      %p218 = por %p216, %p217
      %p220 = scmp.ne.s32.totalorder %s205, %s219
      %p221 = scmp.eq.s32.totalorder %s34, 0
      %p222 = por %p220, %p221
      %s223 = ssub.s32 %s35, %s47
      %s224 = ssub.s32 %s36, %s43
      %s225 = sor.u32 %s223, %s224
      %p226 = scmp.eq.s32.totalorder %s225, 0
      %s228 = sadd.s32 %s227, 1
      %s229 = scalar_select %p226, %s227, %s228
      %p232 = pneg %p226
      %p233 = scmp.eq.s32.totalorder %s28, 1
      %p234 = por %p232, %p233
      %p235 = scmp.ne.s32.totalorder %s227, %s230
      %p236 = scmp.eq.s32.totalorder %s28, 0
      %p237 = por %p235, %p236
      %p238 = scmp.ne.s32.totalorder %s227, %s230
      %p239 = scmp.eq.s32.totalorder %s33, 1
      %p240 = por %p238, %p239
      %p241 = scmp.ne.s32.totalorder %s230, %s231
      %p242 = scmp.eq.s32.totalorder %s33, 0
      %p243 = por %p241, %p242
      %p244 = scmp.ne.s32.totalorder %s230, %s231
      %p245 = scmp.eq.s32.totalorder %s34, 1
      %p246 = por %p244, %p245
      %p248 = scmp.ne.s32.totalorder %s231, %s247
      %p249 = scmp.eq.s32.totalorder %s34, 0
      %p250 = por %p248, %p249
      %s251 = ssub.s32 %s35, %s47
      %s252 = ssub.s32 %s36, %s43
      %s253 = sor.u32 %s251, %s252
      %p254 = scmp.eq.s32.totalorder %s253, 0
      %s256 = sadd.s32 %s255, 1
      %s257 = scalar_select %p254, %s255, %s256
      %p260 = pneg %p254
      %p261 = scmp.eq.s32.totalorder %s28, 1
      %p262 = por %p260, %p261
      %p263 = scmp.ne.s32.totalorder %s255, %s258
      %p264 = scmp.eq.s32.totalorder %s28, 0
      %p265 = por %p263, %p264
      %p266 = scmp.ne.s32.totalorder %s255, %s258
      %p267 = scmp.eq.s32.totalorder %s33, 1
      %p268 = por %p266, %p267
      %p269 = scmp.ne.s32.totalorder %s258, %s259
      %p270 = scmp.eq.s32.totalorder %s33, 0
      %p271 = por %p269, %p270
      %p272 = scmp.ne.s32.totalorder %s258, %s259
      %p273 = scmp.eq.s32.totalorder %s34, 1
      %p274 = por %p272, %p273
      %p276 = scmp.ne.s32.totalorder %s259, %s275
      %p277 = scmp.eq.s32.totalorder %s34, 0
      %p278 = por %p276, %p277
      %s279 = ssub.s32 %s35, %s47
      %s280 = ssub.s32 %s36, %s43
      %s281 = sor.u32 %s279, %s280
      %p282 = scmp.eq.s32.totalorder %s281, 0
      %s284 = sadd.s32 %s283, 1
      %s285 = scalar_select %p282, %s283, %s284
      %p288 = pneg %p282
      %p289 = scmp.eq.s32.totalorder %s28, 1
      %p290 = por %p288, %p289
      %p291 = scmp.ne.s32.totalorder %s283, %s286
      %p292 = scmp.eq.s32.totalorder %s28, 0
      %p293 = por %p291, %p292
      %p294 = scmp.ne.s32.totalorder %s283, %s286
      %p295 = scmp.eq.s32.totalorder %s33, 1
      %p296 = por %p294, %p295
      %p297 = scmp.ne.s32.totalorder %s286, %s287
      %p298 = scmp.eq.s32.totalorder %s33, 0
      %p299 = por %p297, %p298
      %p300 = scmp.ne.s32.totalorder %s286, %s287
      %p301 = scmp.eq.s32.totalorder %s34, 1
      %p302 = por %p300, %p301
      %p304 = scmp.ne.s32.totalorder %s287, %s303
      %p305 = scmp.eq.s32.totalorder %s34, 0
      %p306 = por %p304, %p305
      %p307 = scmp.le.s32.totalorder 1, %s28
      %p308 = scmp.lt.s32.totalorder %s28, 3
      %p309 = pnand %p307, %p308
      %p310 = pneg %p309
      // Predicated region
      $region9: #{tpu_custom_call.1} parent=5 // pred_check
        _
      $region10: #{tpu_custom_call.1} parent=5 // pred_check_branch
        %312 = sbr.rel (%p309) target = $region12
      $region11: #{tpu_custom_call.1} parent=5 // pred_region
        %s313 = ssub.s32 %s28, 1
        // Predicated region
        $region13: #{tpu_custom_call.1} parent=11 // pred_check
          %p314 = pneg %p89
        $region14: #{tpu_custom_call.1} parent=11 // pred_check_branch
          %316 = sbr.rel (%p314) target = $region16
        $region15: #{tpu_custom_call.1} parent=11 // pred_region
          %318 = vsyncadd [#allocation6], 0
          %s320 = sshll.u32 %s1, 4
          %s321 = int_to_ptr.hbm [resolvable:$true] %s320
          %s322 = sshll.u32 [#allocation5], 4
          %s323 = int_to_ptr.vmem [resolvable:$true] %s322
          %325 = dma.hbm_to_vmem [thread:$0]  %s321, 16, %s323, [#allocation6]
        $region16: #{tpu_custom_call.1} parent=11 // pred_fallthru
          _
        // Predicated region
        $region17: #{tpu_custom_call.1} parent=11 // pred_check
          %p326 = pneg %p110
        $region18: #{tpu_custom_call.1} parent=11 // pred_check_branch
          %328 = sbr.rel (%p326) target = $region20
        $region19: #{tpu_custom_call.1} parent=11 // pred_region
          _
        $region20: #{tpu_custom_call.1} parent=11 // pred_fallthru
          _
        // Predicated region
        $region21: #{tpu_custom_call.1} parent=11 // pred_check
          %p329 = pneg %p131
        $region22: #{tpu_custom_call.1} parent=11 // pred_check_branch
          %331 = sbr.rel (%p329) target = $region24
        $region23: #{tpu_custom_call.1} parent=11 // pred_region
          %333 = vsyncadd [#allocation6], 0
          %s334 = sshll.u32 %s3, 4
          %s335 = int_to_ptr.hbm [resolvable:$true] %s334
          %s336 = sshll.u32 [#allocation7], 4
          %s337 = int_to_ptr.vmem [resolvable:$true] %s336
          %342 = dma.hbm_to_vmem [thread:$0]  %s335, 256, %s337, [#allocation6], 64, 64, 4
        $region24: #{tpu_custom_call.1} parent=11 // pred_fallthru
          _
        // Predicated region
        $region25: #{tpu_custom_call.1} parent=11 // pred_check
          %p343 = pneg %p152
        $region26: #{tpu_custom_call.1} parent=11 // pred_check_branch
          %345 = sbr.rel (%p343) target = $region28
        $region27: #{tpu_custom_call.1} parent=11 // pred_region
          _
        $region28: #{tpu_custom_call.1} parent=11 // pred_fallthru
          _
        // Predicated region
        $region29: #{tpu_custom_call.1} parent=11 // pred_check
          %p346 = pneg %p173
        $region30: #{tpu_custom_call.1} parent=11 // pred_check_branch
          %348 = sbr.rel (%p346) target = $region32
        $region31: #{tpu_custom_call.1} parent=11 // pred_region
          %350 = vsyncadd [#allocation9], 0
          %s351 = sshll.u32 %s5, 4
          %s352 = int_to_ptr.hbm [resolvable:$true] %s351
          %s353 = sshll.u32 [#allocation8], 4
          %s354 = int_to_ptr.vmem [resolvable:$true] %s353
          %359 = dma.hbm_to_vmem [thread:$0]  %s352, 256, %s354, [#allocation9], 64, 64, 4
        $region32: #{tpu_custom_call.1} parent=11 // pred_fallthru
          _
        // Predicated region
        $region33: #{tpu_custom_call.1} parent=11 // pred_check
          %p360 = pneg %p194
        $region34: #{tpu_custom_call.1} parent=11 // pred_check_branch
          %362 = sbr.rel (%p360) target = $region36
        $region35: #{tpu_custom_call.1} parent=11 // pred_region
          %364 = vsyncadd [#allocation9], 0
          %s365 = sshll.u32 %s6, 4
          %s366 = int_to_ptr.hbm [resolvable:$true] %s365
          %s367 = sshll.u32 [#allocation10], 4
          %s368 = int_to_ptr.vmem [resolvable:$true] %s367
          %373 = dma.hbm_to_vmem [thread:$0]  %s366, 256, %s368, [#allocation9], 64, 64, 4
        $region36: #{tpu_custom_call.1} parent=11 // pred_fallthru
          _
        // Predicated region
        $region37: #{tpu_custom_call.1} parent=11 // pred_check
          %p374 = pneg %p215
        $region38: #{tpu_custom_call.1} parent=11 // pred_check_branch
          %376 = sbr.rel (%p374) target = $region40
        $region39: #{tpu_custom_call.1} parent=11 // pred_region
          _
        $region40: #{tpu_custom_call.1} parent=11 // pred_fallthru
          _
      $region12: #{tpu_custom_call.1} parent=5 // pred_fallthru
        _
      %p377 = scmp.lt.s32.totalorder %s28, 2
      // Predicated region
      $region41: #{tpu_custom_call.1} parent=5 // pred_check
        %p378 = pneg %p377
      $region42: #{tpu_custom_call.1} parent=5 // pred_check_branch
        %380 = sbr.rel (%p378) target = $region44
      $region43: #{tpu_custom_call.1} parent=5 // pred_region
        // Predicated region
        $region45: #{tpu_custom_call.1} parent=43 // pred_check
          %p381 = pneg %p62
        $region46: #{tpu_custom_call.1} parent=43 // pred_check_branch
          %383 = sbr.rel (%p381) target = $region48
        $region47: #{tpu_custom_call.1} parent=43 // pred_region
          %s384 = sand.u32 %s52, 1
          %s385 = scalar_lea.sflag [#allocation3], %s384
          %s386 = sand.u32 %s52, 1
          %s387 = smul.addr %s386, 8
          %s388 = scalar_lea.vmem [#allocation2], %s387
          %390 = vsyncadd %s385, 0
          %s391 = sadd.s32 %s36, %s35
          %s392 = smul.addr %s391, 8
          %s393 = scalar_lea.hbm %s0, %s392
          %s395 = sshll.u32 %s393, 4
          %s396 = int_to_ptr.hbm [resolvable:$true] %s395
          %s397 = sshll.u32 %s388, 4
          %s398 = int_to_ptr.vmem [resolvable:$true] %s397
          %400 = dma.hbm_to_vmem [thread:$0]  %s396, 128, %s398, %s385
        $region48: #{tpu_custom_call.1} parent=43 // pred_fallthru
          _
      $region44: #{tpu_custom_call.1} parent=5 // pred_fallthru
        _
      %p401 = scmp.le.s32.totalorder 1, %s28
      %p402 = scmp.lt.s32.totalorder %s28, 3
      %p403 = pnand %p401, %p402
      %p404 = pneg %p403
      // Predicated region
      $region49: #{tpu_custom_call.1} parent=5 // pred_check
        _
      $region50: #{tpu_custom_call.1} parent=5 // pred_check_branch
        %406 = sbr.rel (%p403) target = $region52
      $region51: #{tpu_custom_call.1} parent=5 // pred_region
        %s407 = ssub.s32 %s28, 1
        %s408 = sand.u32 %s55, 1
        %s409 = scalar_lea.sflag [#allocation3], %s408
        %s410 = sand.u32 %s55, 1
        %s411 = smul.addr %s410, 8
        %s412 = scalar_lea.vmem [#allocation2], %s411
        // Predicated region
        $region53: #{tpu_custom_call.1} parent=51 // pred_check
          %p413 = pneg %p68
        $region54: #{tpu_custom_call.1} parent=51 // pred_check_branch
          %415 = sbr.rel (%p413) target = $region56
        $region55: #{tpu_custom_call.1} parent=51 // pred_region
          %417 = dma.done %s409, 128
        $region56: #{tpu_custom_call.1} parent=51 // pred_fallthru
          _
        // Predicated region
        $region57: #{tpu_custom_call.1} parent=51 // pred_check
          %p418 = pneg %p89
        $region58: #{tpu_custom_call.1} parent=51 // pred_check_branch
          %420 = sbr.rel (%p418) target = $region60
        $region59: #{tpu_custom_call.1} parent=51 // pred_region
          %422 = dma.done [#allocation6], 16
        $region60: #{tpu_custom_call.1} parent=51 // pred_fallthru
          _
        // Predicated region
        $region61: #{tpu_custom_call.1} parent=51 // pred_check
          %p423 = pneg %p131
        $region62: #{tpu_custom_call.1} parent=51 // pred_check_branch
          %425 = sbr.rel (%p423) target = $region64
        $region63: #{tpu_custom_call.1} parent=51 // pred_region
          %427 = dma.done [#allocation6], 256
        $region64: #{tpu_custom_call.1} parent=51 // pred_fallthru
          _
        // Predicated region
        $region65: #{tpu_custom_call.1} parent=51 // pred_check
          %p428 = pneg %p173
        $region66: #{tpu_custom_call.1} parent=51 // pred_check_branch
          %430 = sbr.rel (%p428) target = $region68
        $region67: #{tpu_custom_call.1} parent=51 // pred_region
          %432 = dma.done [#allocation9], 256
        $region68: #{tpu_custom_call.1} parent=51 // pred_fallthru
          _
        // Predicated region
        $region69: #{tpu_custom_call.1} parent=51 // pred_check
          %p433 = pneg %p194
        $region70: #{tpu_custom_call.1} parent=51 // pred_check_branch
          %435 = sbr.rel (%p433) target = $region72
        $region71: #{tpu_custom_call.1} parent=51 // pred_region
          %437 = dma.done [#allocation9], 256
        $region72: #{tpu_custom_call.1} parent=51 // pred_fallthru
          _
        %s438 = sand.u32 %s55, 1
        %s439 = scalar_lea.sflag [#allocation3], %s438
        %s440 = sand.u32 %s55, 1
        %s441 = smul.addr %s440, 8
        %s442 = scalar_lea.vmem [#allocation2], %s441
        %p443 = pneg %p68
        %p444 = pneg %p65
        %p445 = pneg %p89
        %p446 = pneg %p86
        %p447 = pneg %p110
        %p448 = pneg %p107
        %p449 = pneg %p131
        %p450 = pneg %p128
        %p451 = pneg %p152
        %p452 = pneg %p149
        %p453 = pneg %p173
        %p454 = pneg %p170
        %p455 = pneg %p194
        %p456 = pneg %p191
        %p457 = pneg %p215
        %p458 = pneg %p212
        %p459 = pneg %p243
        %p460 = pneg %p240
        %s461 = sand.u32 %s230, 1
        %s462 = scalar_lea.sflag [#allocation4], %s461
        %s463 = sand.u32 %s230, 1
        %s464 = smul.addr %s463, 16
        %s465 = scalar_lea.vmem [#allocation11], %s464
        %p466 = pneg %p271
        %p467 = pneg %p268
        %s468 = sand.u32 %s33, 1
        %s469 = scalar_lea.sflag [#allocation13], %s468
        %s470 = sand.u32 %s258, 1
        %s471 = smul.addr %s470, 16
        %s472 = scalar_lea.vmem [#allocation12], %s471
        %p473 = pneg %p299
        %p474 = pneg %p296
        %s475 = sand.u32 %s33, 1
        %s476 = scalar_lea.sflag [#allocation13], %s475
        %s477 = sand.u32 %s286, 1
        %s478 = smul.addr %s477, 16
        %s479 = scalar_lea.vmem [#allocation14], %s478
        %v481 = vld [vmem:[%s412] sm:$0xff]
        %v482 = vld [vmem:[#allocation5] sm:$0x1]
        %v483 = vld [vmem:[%s2] sm:$0x1]
        %vm484 = vcmask 261120
        %v485 = vsel %vm484, %v481, 0.0
        %486 = vadd.xlane.f32.xlu0 %v485
        %v487 = vpop.xlane.xlu0 %486
        %v488 = vrcp.pop 32.0
        %v489 = vmul.f32 32.0, %v488
        %v490 = vsub.f32 1.0, %v489
        %v491 = vmul.f32 %v488, %v490
        %v492 = vadd.f32 %v488, %v491
        %vm493 = vweird.f32 %v488
        %v494 = vsel %vm493, %v488, %v492
        %v495 = vmul.f32 %v487, %v494
        %v496 = vsub.f32 %v481, %v495
        %v497 = vmul.f32 %v496, %v496
        %v498 = vsel %vm484, %v497, 0.0
        %499 = vadd.xlane.f32.xlu0 %v498
        %v500 = vpop.xlane.xlu0 %499
        %v501 = vmul.f32 %v500, %v494
        %v502 = vadd.f32 %v501, 1e-05
        %v503 = vrsqrt.pop %v502
        %v504 = vmul.f32 %v503, %v502
        %v505 = vmul.f32 %v504, %v503
        %v506 = vmul.f32 0.5, %v505
        %v507 = vsub.f32 1.5, %v506
        %v508 = vmul.f32 %v503, %v507
        %vm509 = vweird.f32 %v502
        %vm510 = vweird.f32 %v503
        %vm511 = vmor %vm509, %vm510
        %v512 = vsel %vm511, %v503, %v508
        %v513 = vmul.f32 %v496, %v512
        %v515 = vperm.slane %v482, 0
        %v517 = vmul.f32 %v513, %v515
        %v519 = vperm.slane %v483, 0
        %v521 = vadd.f32 %v517, %v519
        %v522 = vpack.c.bf16 %v521, %v521
        %v523 = vld [vmem:[#allocation7] sm:$0xf]
        %v524 = vld [vmem:[#allocation7 + $0x4] sm:$0xf]
        %v525 = vld [vmem:[#allocation7 + $0x8] sm:$0xf]
        %v526 = vld [vmem:[#allocation7 + $0xc] sm:$0xf]
        %v527 = vld [vmem:[%s4] sm:$0x1]
        %v529 = vperm.slane %v527, 0
        %v535 = vunpack.c.l.b16 %v523
        %v536 = vunpack.c.l.b16 %v524
        %v537 = vunpack.c.l.b16 %v525
        %v538 = vunpack.c.l.b16 %v526
        %v539 = vpack.c.b16 %v536, %v535
        %v540 = vpack.c.b16 %v538, %v537
        %v544 = vsel %vm484, %v522, 0
        %546 = vmatpush.bf16.msra.mxu0 0
        %547 = vmatpush.bf16.msra.mxu0 0
        %548 = vmatpush.bf16.msra.mxu0 0
        %549 = vmatpush.bf16.msra.mxu0 0
        %550 = vmatpush.bf16.msra.mxu0 0
        %551 = vmatpush.bf16.msra.mxu0 0
        %552 = vmatpush.bf16.msra.mxu0 %v540
        %553 = vmatpush.bf16.msra.mxu0 %v539
        %554 = vmatmul.bf16.gmra.mxu0 %v544
        %v555 = vpop.f32.mrf.mxu0
        %v556 = vadd.f32 %v529, %v555
        %v557 = vpop.f32.mrf.mxu0
        %558 = vdwg.mxu0
        %v559 = vld [vmem:[#allocation8] sm:$0xf]
        %v560 = vld [vmem:[#allocation8 + $0x4] sm:$0xf]
        %v561 = vld [vmem:[#allocation8 + $0x8] sm:$0xf]
        %v562 = vld [vmem:[#allocation8 + $0xc] sm:$0xf]
        %v567 = vunpack.c.l.b16 %v559
        %v568 = vunpack.c.l.b16 %v560
        %v569 = vunpack.c.l.b16 %v561
        %v570 = vunpack.c.l.b16 %v562
        %v571 = vpack.c.b16 %v568, %v567
        %v572 = vpack.c.b16 %v570, %v569
        %575 = vmatpush.bf16.msra.mxu0 0
        %576 = vmatpush.bf16.msra.mxu0 0
        %577 = vmatpush.bf16.msra.mxu0 0
        %578 = vmatpush.bf16.msra.mxu0 0
        %579 = vmatpush.bf16.msra.mxu0 0
        %580 = vmatpush.bf16.msra.mxu0 0
        %581 = vmatpush.bf16.msra.mxu0 %v572
        %582 = vmatpush.bf16.msra.mxu0 %v571
        %583 = vmatmul.bf16.gmra.mxu0 %v544
        %v584 = vpop.f32.mrf.mxu0
        %v585 = vadd.f32 0.0, %v584
        %v586 = vpop.f32.mrf.mxu0
        %587 = vdwg.mxu0
        %v588 = vld [vmem:[#allocation10] sm:$0xf]
        %v589 = vld [vmem:[#allocation10 + $0x4] sm:$0xf]
        %v590 = vld [vmem:[#allocation10 + $0x8] sm:$0xf]
        %v591 = vld [vmem:[#allocation10 + $0xc] sm:$0xf]
        %v592 = vld [vmem:[%s7] sm:$0x1]
        %v594 = vperm.slane %v592, 0
        %v600 = vunpack.c.l.b16 %v588
        %v601 = vunpack.c.l.b16 %v589
        %v602 = vunpack.c.l.b16 %v590
        %v603 = vunpack.c.l.b16 %v591
        %v604 = vpack.c.b16 %v601, %v600
        %v605 = vpack.c.b16 %v603, %v602
        %608 = vmatpush.bf16.msra.mxu0 0
        %609 = vmatpush.bf16.msra.mxu0 0
        %610 = vmatpush.bf16.msra.mxu0 0
        %611 = vmatpush.bf16.msra.mxu0 0
        %612 = vmatpush.bf16.msra.mxu0 0
        %613 = vmatpush.bf16.msra.mxu0 0
        %614 = vmatpush.bf16.msra.mxu0 %v605
        %615 = vmatpush.bf16.msra.mxu0 %v604
        %616 = vmatmul.bf16.gmra.mxu0 %v544
        %v617 = vpop.f32.mrf.mxu0
        %v618 = vadd.f32 %v594, %v617
        %v619 = vpop.f32.mrf.mxu0
        %620 = vdwg.mxu0
        %v621 = vmul.f32 %v556, 0.59460354
        %v622 = vpack.c.bf16 %v621, %v621
        %v623 = vmul.f32 %v585, 0.59460354
        %v624 = vpack.c.bf16 %v623, %v623
        %v625 = vpack.c.bf16 %v618, %v618
        %vm626 = vcmask 60416
        %627 = vst.msk [vmem:[%s465] sm:$0xf] %vm626, %v622
        %628 = vst.msk [vmem:[%s472] sm:$0xf] %vm626, %v624
        %629 = vst.msk [vmem:[%s479] sm:$0xf] %vm626, %v625
        %631 = vrot.lane.b32.xlu0 %v622, 120
        %v632 = vpop.permute.xlu0 %631
        %s634 = scalar_lea.vmem %s465, 4 [#allocation11]
        %635 = vst.msk [vmem:[%s634] sm:$0xf] %vm626, %v632
        %637 = vrot.lane.b32.xlu0 %v624, 120
        %v638 = vpop.permute.xlu0 %637
        %s640 = scalar_lea.vmem %s472, 4 [#allocation12]
        %641 = vst.msk [vmem:[%s640] sm:$0xf] %vm626, %v638
        %643 = vrot.lane.b32.xlu0 %v625, 120
        %v644 = vpop.permute.xlu0 %643
        %s646 = scalar_lea.vmem %s479, 4 [#allocation14]
        %647 = vst.msk [vmem:[%s646] sm:$0xf] %vm626, %v644
        %648 = vrot.lane.b32.xlu0 %v622, 112
        %v649 = vpop.permute.xlu0 %648
        %s651 = scalar_lea.vmem %s465, 8 [#allocation11]
        %652 = vst.msk [vmem:[%s651] sm:$0xf] %vm626, %v649
        %653 = vrot.lane.b32.xlu0 %v624, 112
        %v654 = vpop.permute.xlu0 %653
        %s656 = scalar_lea.vmem %s472, 8 [#allocation12]
        %657 = vst.msk [vmem:[%s656] sm:$0xf] %vm626, %v654
        %658 = vrot.lane.b32.xlu0 %v625, 112
        %v659 = vpop.permute.xlu0 %658
        %s661 = scalar_lea.vmem %s479, 8 [#allocation14]
        %662 = vst.msk [vmem:[%s661] sm:$0xf] %vm626, %v659
        %663 = vrot.lane.b32.xlu0 %v622, 104
        %v664 = vpop.permute.xlu0 %663
        %s666 = scalar_lea.vmem %s465, 12 [#allocation11]
        %667 = vst.msk [vmem:[%s666] sm:$0xf] %vm626, %v664
        %668 = vrot.lane.b32.xlu0 %v624, 104
        %v669 = vpop.permute.xlu0 %668
        %s671 = scalar_lea.vmem %s472, 12 [#allocation12]
        %672 = vst.msk [vmem:[%s671] sm:$0xf] %vm626, %v669
        %673 = vrot.lane.b32.xlu0 %v625, 104
        %v674 = vpop.permute.xlu0 %673
        %s676 = scalar_lea.vmem %s479, 12 [#allocation14]
        %677 = vst.msk [vmem:[%s676] sm:$0xf] %vm626, %v674
        %s678 = sand.u32 %s230, 1
        %s679 = scalar_lea.sflag [#allocation4], %s678
        %s680 = sand.u32 %s230, 1
        %s681 = smul.addr %s680, 16
        %s682 = scalar_lea.vmem [#allocation11], %s681
        %s683 = sand.u32 %s33, 1
        %s684 = scalar_lea.sflag [#allocation13], %s683
        %s685 = sand.u32 %s258, 1
        %s686 = smul.addr %s685, 16
        %s687 = scalar_lea.vmem [#allocation12], %s686
        %s688 = sand.u32 %s33, 1
        %s689 = scalar_lea.sflag [#allocation13], %s688
        %s690 = sand.u32 %s286, 1
        %s691 = smul.addr %s690, 16
        %s692 = scalar_lea.vmem [#allocation14], %s691
        // Predicated region
        $region73: #{tpu_custom_call.1} parent=51 // pred_check
          %p693 = pneg %p240
        $region74: #{tpu_custom_call.1} parent=51 // pred_check_branch
          %695 = sbr.rel (%p693) target = $region76
        $region75: #{tpu_custom_call.1} parent=51 // pred_region
          %697 = vsyncadd %s679, 0
          %s698 = smul.addr %s37, 4
          %s699 = sadd.s32 %s38, %s698
          %s700 = smul.addr %s699, 4
          %s701 = scalar_lea.hbm %s8, %s700
          %s702 = sshll.u32 %s682, 4
          %s703 = int_to_ptr.vmem [resolvable:$true] %s702
          %s704 = sshll.u32 %s701, 4
          %s705 = int_to_ptr.hbm [resolvable:$true] %s704
          %710 = dma.vmem_to_hbm [thread:$0]  %s703, 256, %s705, %s679, 64, 64, 4
        $region76: #{tpu_custom_call.1} parent=51 // pred_fallthru
          _
        // Predicated region
        $region77: #{tpu_custom_call.1} parent=51 // pred_check
          %p711 = pneg %p268
        $region78: #{tpu_custom_call.1} parent=51 // pred_check_branch
          %713 = sbr.rel (%p711) target = $region80
        $region79: #{tpu_custom_call.1} parent=51 // pred_region
          %715 = vsyncadd %s684, 0
          %s716 = smul.addr %s37, 4
          %s717 = sadd.s32 %s38, %s716
          %s718 = smul.addr %s717, 4
          %s719 = scalar_lea.hbm %s9, %s718
          %s720 = sshll.u32 %s687, 4
          %s721 = int_to_ptr.vmem [resolvable:$true] %s720
          %s722 = sshll.u32 %s719, 4
          %s723 = int_to_ptr.hbm [resolvable:$true] %s722
          %728 = dma.vmem_to_hbm [thread:$0]  %s721, 256, %s723, %s684, 64, 64, 4
        $region80: #{tpu_custom_call.1} parent=51 // pred_fallthru
          _
        // Predicated region
        $region81: #{tpu_custom_call.1} parent=51 // pred_check
          %p729 = pneg %p296
        $region82: #{tpu_custom_call.1} parent=51 // pred_check_branch
          %731 = sbr.rel (%p729) target = $region84
        $region83: #{tpu_custom_call.1} parent=51 // pred_region
          %733 = vsyncadd %s689, 0
          %s734 = smul.addr %s37, 4
          %s735 = sadd.s32 %s38, %s734
          %s736 = smul.addr %s735, 4
          %s737 = scalar_lea.hbm %s10, %s736
          %s738 = sshll.u32 %s692, 4
          %s739 = int_to_ptr.vmem [resolvable:$true] %s738
          %s740 = sshll.u32 %s737, 4
          %s741 = int_to_ptr.hbm [resolvable:$true] %s740
          %746 = dma.vmem_to_hbm [thread:$0]  %s739, 256, %s741, %s689, 64, 64, 4
        $region84: #{tpu_custom_call.1} parent=51 // pred_fallthru
          _
      $region52: #{tpu_custom_call.1} parent=5 // pred_fallthru
        _
      %p747 = scmp.le.s32.totalorder 2, %s28
      // Predicated region
      $region85: #{tpu_custom_call.1} parent=5 // pred_check
        %p748 = pneg %p747
      $region86: #{tpu_custom_call.1} parent=5 // pred_check_branch
        %750 = sbr.rel (%p748) target = $region88
      $region87: #{tpu_custom_call.1} parent=5 // pred_region
        %s751 = ssub.s32 %s28, 2
        // Predicated region
        $region89: #{tpu_custom_call.1} parent=87 // pred_check
          %p752 = pneg %p246
        $region90: #{tpu_custom_call.1} parent=87 // pred_check_branch
          %754 = sbr.rel (%p752) target = $region92
        $region91: #{tpu_custom_call.1} parent=87 // pred_region
          %s755 = sand.u32 %s231, 1
          %s756 = scalar_lea.sflag [#allocation4], %s755
          %s757 = sand.u32 %s231, 1
          %s758 = smul.addr %s757, 16
          %s759 = scalar_lea.vmem [#allocation11], %s758
          %761 = dma.done %s756, 256
        $region92: #{tpu_custom_call.1} parent=87 // pred_fallthru
          _
        // Predicated region
        $region93: #{tpu_custom_call.1} parent=87 // pred_check
          %p762 = pneg %p274
        $region94: #{tpu_custom_call.1} parent=87 // pred_check_branch
          %764 = sbr.rel (%p762) target = $region96
        $region95: #{tpu_custom_call.1} parent=87 // pred_region
          %s765 = sand.u32 %s34, 1
          %s766 = scalar_lea.sflag [#allocation13], %s765
          %s767 = sand.u32 %s259, 1
          %s768 = smul.addr %s767, 16
          %s769 = scalar_lea.vmem [#allocation12], %s768
          %771 = dma.done %s766, 256
        $region96: #{tpu_custom_call.1} parent=87 // pred_fallthru
          _
        // Predicated region
        $region97: #{tpu_custom_call.1} parent=87 // pred_check
          %p772 = pneg %p302
        $region98: #{tpu_custom_call.1} parent=87 // pred_check_branch
          %774 = sbr.rel (%p772) target = $region100
        $region99: #{tpu_custom_call.1} parent=87 // pred_region
          %s775 = sand.u32 %s34, 1
          %s776 = scalar_lea.sflag [#allocation13], %s775
          %s777 = sand.u32 %s287, 1
          %s778 = smul.addr %s777, 16
          %s779 = scalar_lea.vmem [#allocation14], %s778
          %781 = dma.done %s776, 256
        $region100: #{tpu_custom_call.1} parent=87 // pred_fallthru
          _
      $region88: #{tpu_custom_call.1} parent=5 // pred_fallthru
        _
    $region6: #{tpu_custom_call.1} parent=1 // loop_footer
      %s32 = sadd.s32 1, %s28
    $region7: #{tpu_custom_call.1} parent=1 // loop_footer_branch
      %27 = sbr.rel target = $region3
    $region8: #{tpu_custom_call.1} parent=1 // loop_exit
      _
    %782 = vsyncpa [#allocation3], 1
    %s783 = scalar_lea.sflag [#allocation3], 1
    %784 = vsyncpa %s783, 1
    %785 = vsyncpa [#allocation6], 1
    %786 = vsyncpa [#allocation9], 1
    %787 = vsyncpa [#allocation4], 1
    %s788 = scalar_lea.sflag [#allocation4], 1
    %789 = vsyncpa %s788, 1
    %790 = vsyncpa [#allocation13], 1
    %s791 = scalar_lea.sflag [#allocation13], 1
    %792 = vsyncpa %s791, 1

</llo_original>
